<compile_context>
chip_gen: v7x
topology: tpu7x:2x2x1
jax: 0.10.0
libtpu: 0.0.40
codegen_flags: <defaults>
</compile_context>

<pallas_src>
import math

import jax
import jax.numpy as jnp
from jax.experimental import pallas as pl
from jax.experimental.pallas import tpu as pltpu

_SHIFT = float(math.log(2.0))  # matches torch.log(torch.tensor(2.0)).item()


def _shifted_softplus_kernel(x_ref, o_ref):
    xf = x_ref[...].astype(jnp.float32)
    # Numerically stable softplus: log(1 + exp(x)) = max(x, 0) + log1p(exp(-|x|)).
    # 2 transcendentals/elem (exp + log) share the single EUP slot: free filler
    # under the HBM roofline on v5e/v6e.  On v7x bf16 (~3.2 TB/s) the EUP could
    # become the binding unit; if a bundle dump confirms that, keep exp on the
    # EUP and replace log1p(t), t in (0,1], with a short VPU polynomial.
    sp = jnp.maximum(xf, 0.0) + jnp.log1p(jnp.exp(-jnp.abs(xf)))
    o_ref[...] = (sp - _SHIFT).astype(o_ref.dtype)


def _round_up(v, m):
    return -(-v // m) * m


def _tpu_params():
    """(tile_bytes, vmem_limit_bytes, num_tensorcores) for the local device."""
    kind = ""
    try:
        kind = jax.devices()[0].device_kind.lower()
    except Exception:
        pass
    newer = any(t in kind for t in ("v6", "v7", "7x"))
    tile_bytes = 4 * 1024 * 1024 if newer else 2 * 1024 * 1024
    vmem_limit = 32 * 1024 * 1024 if newer else 16 * 1024 * 1024
    # Chips exposing 2 TensorCores per JAX device (megacore v4/v5p, v7x).
    if any(t in kind for t in ("v7", "7x", "v4")) or (
            "v5" in kind and "lite" not in kind and "v5e" not in kind):
        num_tc = 2
    else:
        num_tc = 1
    # Clamp by physical VMEM when queryable (v7x: 64 MiB/TC vs 128 on v5e/v6e).
    try:
        cap = int(pltpu.get_tpu_info().vmem_capacity_bytes)
        tile_bytes = min(tile_bytes, cap // 16)   # in+out, double-buffered, + headroom
        vmem_limit = min(vmem_limit, cap // 2)
    except Exception:
        pass
    vmem_limit = max(vmem_limit, 5 * tile_bytes)
    return tile_bytes, vmem_limit, num_tc


def _ragged_view(x, n, itemsize, sublane, tile_bytes):
    """Free-reshape x into (R, C): C is a product of a trailing run of original
    dims (contiguous collapse => no HBM copy).  Pick the C with the best lane
    utilization that still fits a sublane-tall tile in VMEM.  Returns None when
    every candidate is poor (caller falls back to the padded path)."""
    dims = tuple(int(d) for d in x.shape) if x.ndim > 0 else (1,)
    candidates = [1]
    c = 1
    for d in reversed(dims):
        c *= d
        candidates.append(c)
    best = None  # (lane utilization, C)
    for c in candidates:
        lanes = _round_up(c, 128)
        if lanes * itemsize * sublane > tile_bytes:
            continue  # even one sublane-tall tile would blow the VMEM budget
        util = c / lanes
        if best is None or (util, c) > best:
            best = (util, c)
    if best is None or best[0] < 0.5:
        return None
    c = best[1]
    return x.reshape(n // c, c)


def _row_tile(r, w, itemsize, sublane, tile_bytes, num_tc):
    """Row-tile size: biggest that fits the VMEM budget; >=4 near-equal blocks
    on 2-TC chips (megacore load balance), single block on 1-TC chips."""
    lanes = _round_up(w, 128)
    max_rows = max(sublane, (tile_bytes // (lanes * itemsize)) // sublane * sublane)
    nb_min = 2 * num_tc if (num_tc >= 2 and r >= 2 * sublane) else 1
    nb = max(nb_min, pl.cdiv(r, max_rows))
    if nb <= 1:
        return r  # single block; full row extent (no sublane rounding needed)
    return min(max_rows, max(sublane, _round_up(pl.cdiv(r, nb), sublane)))


def _run(x2, out_dtype, vmem_limit, tr):
    r, w = x2.shape
    n = r * w
    itemsize = jnp.dtype(out_dtype).itemsize
    return pl.pallas_call(
        _shifted_softplus_kernel,
        out_shape=jax.ShapeDtypeStruct((r, w), out_dtype),
        grid_spec=pltpu.PrefetchScalarGridSpec(
            num_scalar_prefetch=0,
            grid=(pl.cdiv(r, tr),),
            in_specs=[pl.BlockSpec((tr, w), lambda i: (i, 0))],
            out_specs=pl.BlockSpec((tr, w), lambda i: (i, 0)),
        ),
        compiler_params=pltpu.CompilerParams(
            dimension_semantics=("parallel",),
            vmem_limit_bytes=int(vmem_limit),
        ),
        cost_estimate=pl.CostEstimate(
            flops=5 * n, transcendentals=2 * n, bytes_accessed=2 * n * itemsize),
    )(x2)


def shifted_softplus(x, *, lane_width=1024):
    """Elementwise softplus(x) - log(2) for any shape / float dtype."""
    orig_shape = x.shape
    if not jnp.issubdtype(x.dtype, jnp.floating):
        x = x.astype(jnp.float32)  # softplus is only defined for float outputs
    dtype = x.dtype
    n = int(math.prod(orig_shape)) if orig_shape else 1
    if n == 0:
        return x

    tile_bytes, vmem_limit, num_tc = _tpu_params()
    itemsize = jnp.dtype(dtype).itemsize
    sublane = max(8, 32 // itemsize)  # 8 for f32, 16 for bf16, 32 for 8-bit

    if n % 128 == 0:
        # Lane-aligned: flatten (free) and pick the widest power-of-two lane
        # width (multiple of 128) dividing n -> full-lane unmasked vst, no pad.
        w = 128
        while w * 2 <= lane_width and n % (w * 2) == 0:
            w *= 2
        x2 = x.reshape(-1, w)
    else:
        # Ragged: free-reshape to (R, C) with C a full-extent last block dim,
        # so no pad / slice HBM round trips are needed.
        x2 = _ragged_view(x, n, itemsize, sublane, tile_bytes)

    if x2 is not None:
        tr = _row_tile(x2.shape[0], x2.shape[1], itemsize, sublane, tile_bytes, num_tc)
        out2 = _run(x2, dtype, vmem_limit, tr)
        return out2.reshape(orig_shape)

    # Fallback (rare: huge 1-D ragged arrays / tiny trailing dims, where
    # masked-lane waste would exceed the cost of one pad + one slice copy).
    flat = x.reshape(-1)
    w = lane_width if n >= lane_width else _round_up(n, 128)
    padded = jnp.pad(flat, (0, _round_up(n, w) - n))
    r = padded.size // w
    tr = _row_tile(r, w, itemsize, sublane, tile_bytes, num_tc)
    out2 = _run(padded.reshape(r, w), dtype, vmem_limit, tr)
    return out2.reshape(-1)[:n].reshape(orig_shape)


if __name__ == "__main__":
    key = jax.random.PRNGKey(0)
    k1, k2, k3, k4 = jax.random.split(key, 4)

    # SchNet-like activation: (num_nodes=32, hidden=64).
    x1 = jax.random.normal(k1, (32, 64), dtype=jnp.float32) * 3.0
    # Ragged shape (exercises the no-pad ragged path).
    x2 = jax.random.normal(k2, (7, 33), dtype=jnp.float32) * 3.0
    # Larger lane-aligned path (single big tile on 1-TC, split on 2-TC chips).
    x3 = jax.random.normal(k3, (1024, 256), dtype=jnp.float32) * 3.0
    # bf16 I/O stays bf16 in HBM; ragged 3-D shape.
    x4 = (jax.random.normal(k4, (4, 3, 50), dtype=jnp.float32) * 3.0).astype(jnp.bfloat16)

    ln2 = math.log(2.0)

    for x, atol, rtol in ((x1, 1e-5, 1e-5), (x2, 1e-5, 1e-5), (x3, 1e-5, 1e-5)):
        y = jax.block_until_ready(shifted_softplus(x))
        ref = jax.nn.softplus(x) - ln2
        assert y.shape == x.shape and y.dtype == x.dtype
        assert jnp.allclose(y, ref, atol=atol, rtol=rtol)

    y4 = jax.block_until_ready(shifted_softplus(x4))
    ref4 = jax.nn.softplus(x4.astype(jnp.float32)) - ln2
    assert y4.shape == x4.shape and y4.dtype == x4.dtype
    assert jnp.allclose(y4.astype(jnp.float32), ref4, atol=5e-2, rtol=5e-2)

    print("KERNEL_OK")
</pallas_src>

<mosaic_0001>
module attributes {stable_mosaic.version = 11 : i64} {
  func.func @_shifted_softplus_kernel(%arg0: i32, %arg1: memref<2x1024xf32, #tpu.memory_space<vmem>>, %arg2: memref<2x1024xf32, #tpu.memory_space<vmem>>) attributes {dimension_semantics = [#tpu.dimension_semantics<parallel>], iteration_bounds = array<i64: 1>, scalar_prefetch = 0 : i64, scratch_operands = 0 : i64, tpu.core_type = #tpu.core_type<tc>, window_params = [{transform_indices = @transform_0, window_bounds = array<i64: 2, 1024>}, {transform_indices = @transform_1, window_bounds = array<i64: 2, 1024>}]} {
    %c0 = arith.constant 0 : index
    %c0_0 = arith.constant 0 : index
    %0 = vector.load %arg1[%c0, %c0_0] : memref<2x1024xf32, #tpu.memory_space<vmem>>, vector<2x1024xf32>
    %cst = arith.constant 0.000000e+00 : f32
    %1 = vector.broadcast %cst : f32 to vector<2x1024xf32>
    %2 = arith.maximumf %0, %1 : vector<2x1024xf32>
    %3 = math.absf %0 : vector<2x1024xf32>
    %cst_1 = arith.constant 0.000000e+00 : f32
    %4 = vector.broadcast %cst_1 : f32 to vector<2x1024xf32>
    %5 = arith.subf %4, %3 : vector<2x1024xf32>
    %6 = math.exp %5 : vector<2x1024xf32>
    %7 = math.log1p %6 : vector<2x1024xf32>
    %8 = arith.addf %2, %7 : vector<2x1024xf32>
    %cst_2 = arith.constant 0.693147182 : f32
    %9 = vector.broadcast %cst_2 : f32 to vector<2x1024xf32>
    %10 = arith.subf %8, %9 : vector<2x1024xf32>
    %c0_3 = arith.constant 0 : index
    %c0_4 = arith.constant 0 : index
    %11 = vector.load %arg2[%c0_3, %c0_4] : memref<2x1024xf32, #tpu.memory_space<vmem>>, vector<2x1024xf32>
    tpu.vector_store %arg2[%c0_3, %c0_4], %10 {strides = array<i32>} : memref<2x1024xf32, #tpu.memory_space<vmem>>, vector<2x1024xf32>,
    return
  }
  func.func @transform_0(%arg0: i32) -> (i32, i32) {
    %c0_i32 = arith.constant 0 : i32
    %c0_i32_0 = arith.constant 0 : i32
    return %arg0, %c0_i32 : i32, i32
  }
  func.func @transform_1(%arg0: i32) -> (i32, i32) {
    %c0_i32 = arith.constant 0 : i32
    %c0_i32_0 = arith.constant 0 : i32
    return %arg0, %c0_i32 : i32, i32
  }
}

</mosaic_0001>

<llo_original>
// kernel: tpu_custom_call.1
$region0: #{tpu_custom_call.1}
  #allocation0 [shape = 'u32[]', space=smem, size = 0x4, offset = 0x4, fixed_abs, tag = 'smem constant byte address 0x4 - core index']
  #allocation1 [shape = 'u32[144,128]{1,0:T(1,128)}', space=vmem, size = 0x12000, scoped, tag = 'internal scratch']
  %s0 = inlined_call_operand.hbm [shape: f32[2,1024], index: 0, kind: input, shape index: {}]
  %s1 = inlined_call_operand.hbm [shape: f32[2,1024], index: 1, kind: output, shape index: {}]
  %s2 = sld [smem:[#allocation0]]
  $region18: #{tpu_custom_call.1} parent=0
    _
  %s4 = ssub.s32 1, %s2
  %s5 = scalar_select 0, %s4, %s2
  $region1: #{tpu_custom_call.1} parent=0
    #allocation2 [shape = 'u8[8192]{0}', space=vmem, size = 0x2000, scoped, tag = 'input window, operand 0, single buffered']
    #allocation3 [shape = 's32[1]{0}', space=sflag, size = 0x4, scoped, tag = 'scoped memory for tpu_custom_call.1']
    #allocation4 [shape = 's32[1]{0}', space=sflag, size = 0x4, scoped, tag = 'scoped memory for tpu_custom_call.1']
    #allocation5 [shape = 'u8[8192]{0}', space=vmem, size = 0x2000, scoped, tag = 'output window, operand 0, single buffered']
    %6 = vsyncpa [#allocation3], 0
    %7 = vsyncpa [#allocation4], 0
    // Predicated region
    $region2: #{tpu_custom_call.1} parent=1 // pred_check
      _
    $region3: #{tpu_custom_call.1} parent=1 // pred_check_branch
      %9 = sbr.rel (0) target = $region5
    $region4: #{tpu_custom_call.1} parent=1 // pred_region
      %s11 = ssub.s32 256, 256
      %12 = vsyncadd [#allocation3], %s11
      %s14 = sshll.u32 [#allocation2], 4
      %s15 = int_to_ptr.vmem [resolvable:$true] %s14
      %17 = dma.hbm_to_vmem [thread:$0]  %s0, 256, %s15, [#allocation3]
    $region5: #{tpu_custom_call.1} parent=1 // pred_fallthru
      _
    // Predicated region
    $region6: #{tpu_custom_call.1} parent=1 // pred_check
      _
    $region7: #{tpu_custom_call.1} parent=1 // pred_check_branch
      %19 = sbr.rel (0) target = $region9
    $region8: #{tpu_custom_call.1} parent=1 // pred_region
      %20 = dma.done [#allocation3], 256
    $region9: #{tpu_custom_call.1} parent=1 // pred_fallthru
      _
    %v21 = vld [vmem:[#allocation2] sm:$0xff]
    %v22 = vld [vmem:[#allocation2 + $0x8] sm:$0xff]
    %v23 = vmax.f32 %v21, 0.0
    %v24 = vmax.f32 %v22, 0.0
    %v25 = vand.u32 2147483647, %v21
    %v26 = vand.u32 2147483647, %v22
    %v27 = vsub.f32 0.0, %v25
    %v28 = vsub.f32 0.0, %v26
    %v29 = vmul.f32 %v27, 1.442695
    %v30 = vpow.pop %v29
    %v31 = vmul.f32 %v28, 1.442695
    %v32 = vpow.pop %v31
    %v33 = vadd.f32 %v30, 1.0
    %v34 = vlog2.pop %v33
    %v35 = vmul.f32 %v34, 0.6931472
    %v36 = vmul.f32 -0.5, %v30
    %v37 = vadd.f32 %v36, 1.0
    %v38 = vmul.f32 %v37, %v30
    %v39 = vand.u32 2147483647, %v30
    %vm40 = vcmp.lt.f32.partialorder %v39, 0.0004427343
    %v41 = vsel %vm40, %v38, %v35
    %v42 = vadd.f32 %v32, 1.0
    %v43 = vlog2.pop %v42
    %v44 = vmul.f32 %v43, 0.6931472
    %v45 = vmul.f32 -0.5, %v32
    %v46 = vadd.f32 %v45, 1.0
    %v47 = vmul.f32 %v46, %v32
    %v48 = vand.u32 2147483647, %v32
    %vm49 = vcmp.lt.f32.partialorder %v48, 0.0004427343
    %v50 = vsel %vm49, %v47, %v44
    %v51 = vadd.f32 %v23, %v41
    %v52 = vadd.f32 %v24, %v50
    %v53 = vsub.f32 %v51, 0.6931472
    %v54 = vsub.f32 %v52, 0.6931472
    %55 = vst [vmem:[#allocation5] sm:$0xff] %v53
    %56 = vst [vmem:[#allocation5 + $0x8] sm:$0xff] %v54
    // Predicated region
    $region10: #{tpu_custom_call.1} parent=1 // pred_check
      _
    $region11: #{tpu_custom_call.1} parent=1 // pred_check_branch
      %58 = sbr.rel (0) target = $region13
    $region12: #{tpu_custom_call.1} parent=1 // pred_region
      %s60 = ssub.s32 256, 256
      %61 = vsyncadd [#allocation4], %s60
      %s63 = sshll.u32 [#allocation5], 4
      %s64 = int_to_ptr.vmem [resolvable:$true] %s63
      %66 = dma.vmem_to_hbm [thread:$0]  %s64, 256, %s1, [#allocation4]
    $region13: #{tpu_custom_call.1} parent=1 // pred_fallthru
      _
    // Predicated region
    $region14: #{tpu_custom_call.1} parent=1 // pred_check
      _
    $region15: #{tpu_custom_call.1} parent=1 // pred_check_branch
      %68 = sbr.rel (0) target = $region17
    $region16: #{tpu_custom_call.1} parent=1 // pred_region
      %69 = dma.done [#allocation4], 256
    $region17: #{tpu_custom_call.1} parent=1 // pred_fallthru
      _
    %70 = vsyncpa [#allocation3], 1
    %71 = vsyncpa [#allocation4], 1

</llo_original>
